<compile_context>
chip_gen: v7x
topology: tpu7x:2x2x1
jax: 0.10.0
libtpu: 0.0.40
codegen_flags: <defaults>
</compile_context>

<pallas_src>
import jax
import jax.numpy as jnp
from jax.experimental import pallas as pl
from jax.experimental.pallas import tpu as pltpu

_LANE = 128
_MAX_TILE = 32768          # single-tile up to 32K batch lanes (~few MiB VMEM)


def _round_up(n, m):
    return ((n + m - 1) // m) * m


def _mlp_kernel(xt_ref, w1_ref, b1_ref, w2_ref, b2_ref, ot_ref):
    # Transposed "batch-on-lanes" layout:
    #   xt : [obs, TB]            w1: [hidden, obs]      b1: [hidden, 1]
    #   w2 : [n_actions, hidden]  b2: [n_actions, 1]     ot: [n_actions, TB]
    xt = xt_ref[...]
    # Layer 1: [hidden, obs] @ [obs, TB] -> [hidden, TB], f32 accumulation.
    h = jnp.dot(w1_ref[...], xt, preferred_element_type=jnp.float32)
    h = jnp.maximum(h + b1_ref[...], 0.0)                  # bias + ReLU (VPU)
    # Layer 2: [n_actions, hidden] @ [hidden, TB] -> [n_actions, TB].
    # Keep the f32 layer-1 result at full precision (cast the tiny weight up
    # instead of downcasting h if params are ever bf16).
    o = jnp.dot(w2_ref[...].astype(jnp.float32), h,
                preferred_element_type=jnp.float32)
    ot_ref[...] = (o + b2_ref[...]).astype(ot_ref.dtype)


def net_forward_t(xt, w1, b1c, w2, b2c):
    """Primary (fast) path, transposed layout end-to-end.

    xt : [obs, B]           activations, batch on lanes
    w1 : [hidden, obs]      b1c: [hidden, 1]
    w2 : [n_actions, hidden] b2c: [n_actions, 1]
    returns [n_actions, B]
    """
    obs, B = xt.shape
    hidden = w1.shape[0]
    n_actions = w2.shape[0]

    if B <= _MAX_TILE:
        # Single tile; block == full array, so the (8,128) divisibility rule
        # does not apply and no batch padding is needed. grid=(1,).
        tb, b_pad, grid = B, B, (1,)
        xt_p = xt
    else:
        # Huge-rollout fallback: pick a 128-multiple tile that bounds padding
        # waste to < 128 lanes per tile (never ~2x like a fixed tile would).
        n_tiles = pl.cdiv(_round_up(B, _LANE), _MAX_TILE)
        tb = _round_up(pl.cdiv(B, n_tiles), _LANE)
        b_pad = tb * n_tiles
        grid = (n_tiles,)
        xt_p = jnp.pad(xt, ((0, 0), (0, b_pad - B)))

    out_t = pl.pallas_call(
        _mlp_kernel,
        out_shape=jax.ShapeDtypeStruct((n_actions, b_pad), xt.dtype),
        grid=grid,
        in_specs=[
            # Activations: tiled over the batch (lane) axis.
            pl.BlockSpec((obs, tb), lambda i: (0, i)),
            # Params: constant block index -> VMEM-resident, no re-DMA.
            pl.BlockSpec((hidden, obs), lambda i: (0, 0)),
            pl.BlockSpec((hidden, 1), lambda i: (0, 0)),
            pl.BlockSpec((n_actions, hidden), lambda i: (0, 0)),
            pl.BlockSpec((n_actions, 1), lambda i: (0, 0)),
        ],
        out_specs=pl.BlockSpec((n_actions, tb), lambda i: (0, i)),
        # Not VMEM-limited and not worth a core split at these sizes; keep the
        # (usually length-1) grid axis as a plain sequential loop.
        compiler_params=pltpu.CompilerParams(
            dimension_semantics=("arbitrary",)),
    )(xt_p, w1, b1c, w2, b2c)

    if b_pad != B:
        out_t = out_t[:, :B]
    return out_t


def prepare_params(w1, b1, w2, b2):
    """PyTorch nn.Linear params ([out,in] weights, [out] biases) -> kernel
    layout. Only the biases need reshaping to column vectors; do this once."""
    hidden, _ = w1.shape
    n_actions, _ = w2.shape
    return w1, jnp.reshape(b1, (hidden, 1)), w2, jnp.reshape(b2, (n_actions, 1))


def net_forward(x, w1, b1, w2, b2):
    """PyTorch-layout compatibility wrapper: x [B, obs] -> [B, n_actions].
    Pays two transposes around a ~microsecond kernel; prefer net_forward_t
    with a transposed rollout buffer for the hot inference path."""
    kw1, kb1, kw2, kb2 = prepare_params(w1, b1, w2, b2)
    return net_forward_t(x.T, kw1, kb1, kw2, kb2).T


def init_params(key, obs_size, hidden_size, n_actions, dtype=jnp.float32):
    """Deterministic init mimicking PyTorch nn.Linear default
    (U(-1/sqrt(fan_in), +1/sqrt(fan_in))), in PyTorch [out, in] layout."""
    k1, k2, k3, k4 = jax.random.split(key, 4)
    bound1 = 1.0 / jnp.sqrt(obs_size)
    bound2 = 1.0 / jnp.sqrt(hidden_size)
    w1 = jax.random.uniform(k1, (hidden_size, obs_size), dtype, -bound1, bound1)
    b1 = jax.random.uniform(k2, (hidden_size,), dtype, -bound1, bound1)
    w2 = jax.random.uniform(k3, (n_actions, hidden_size), dtype, -bound2, bound2)
    b2 = jax.random.uniform(k4, (n_actions,), dtype, -bound2, bound2)
    return w1, b1, w2, b2


def _reference(x, w1, b1, w2, b2):
    # PyTorch semantics: y = ReLU(x @ W1^T + b1) @ W2^T + b2
    return jnp.maximum(x @ w1.T + b1, 0.0) @ w2.T + b2


if __name__ == "__main__":
    # CartPole-like sizes: obs=4, hidden=32, actions=2.
    obs_size, hidden_size, n_actions = 4, 32, 2

    key = jax.random.PRNGKey(0)
    kx, kp, kb = jax.random.split(key, 3)
    w1, b1, w2, b2 = init_params(kp, obs_size, hidden_size, n_actions)
    kw1, kb1, kw2, kb2 = prepare_params(w1, b1, w2, b2)

    fwd_t = jax.jit(net_forward_t)   # transposed end-to-end (no wrapper ops)
    fwd = jax.jit(net_forward)       # PyTorch-layout compatibility path

    # 1) Per-step inference, activations kept transposed end-to-end
    #    (B=8, single full-array tile, grid=(1,), no padding at all).
    xt_small = jax.random.normal(kx, (obs_size, 8), jnp.float32)
    out_t = jax.block_until_ready(fwd_t(xt_small, kw1, kb1, kw2, kb2))
    ref_t = _reference(xt_small.T, w1, b1, w2, b2).T
    assert out_t.shape == (n_actions, 8)
    assert jnp.allclose(out_t, ref_t, atol=1e-5, rtol=1e-5)

    # 2) Rollout-style batched call in the PyTorch layout
    #    (B=1000: still grid=(1,), block == full array, no padding).
    x_big = jax.random.normal(kb, (1000, obs_size), jnp.float32)
    out_big = jax.block_until_ready(fwd(x_big, w1, b1, w2, b2))
    ref_big = _reference(x_big, w1, b1, w2, b2)
    assert out_big.shape == (1000, n_actions)
    assert jnp.allclose(out_big, ref_big, atol=1e-5, rtol=1e-5)

    print("KERNEL_OK")
</pallas_src>

<mosaic_0001>
module attributes {stable_mosaic.version = 11 : i64} {
  func.func @_mlp_kernel(%arg0: i32, %arg1: memref<4x8xf32, #tpu.memory_space<vmem>>, %arg2: memref<32x4xf32, #tpu.memory_space<vmem>>, %arg3: memref<32x1xf32, #tpu.memory_space<vmem>>, %arg4: memref<2x32xf32, #tpu.memory_space<vmem>>, %arg5: memref<2x1xf32, #tpu.memory_space<vmem>>, %arg6: memref<2x8xf32, #tpu.memory_space<vmem>>) attributes {dimension_semantics = [#tpu.dimension_semantics<arbitrary>], iteration_bounds = array<i64: 1>, scalar_prefetch = 0 : i64, scratch_operands = 0 : i64, tpu.core_type = #tpu.core_type<tc>, window_params = [{transform_indices = @transform_0, window_bounds = array<i64: 4, 8>}, {pipeline_mode = #tpu.pipeline_mode<synchronous>, transform_indices = @transform_1, window_bounds = array<i64: 32, 4>}, {pipeline_mode = #tpu.pipeline_mode<synchronous>, transform_indices = @transform_2, window_bounds = array<i64: 32, 1>}, {pipeline_mode = #tpu.pipeline_mode<synchronous>, transform_indices = @transform_3, window_bounds = array<i64: 2, 32>}, {pipeline_mode = #tpu.pipeline_mode<synchronous>, transform_indices = @transform_4, window_bounds = array<i64: 2, 1>}, {transform_indices = @transform_5, window_bounds = array<i64: 2, 8>}]} {
    %c0 = arith.constant 0 : index
    %c0_0 = arith.constant 0 : index
    %0 = vector.load %arg1[%c0, %c0_0] : memref<4x8xf32, #tpu.memory_space<vmem>>, vector<4x8xf32>
    %c0_1 = arith.constant 0 : index
    %c0_2 = arith.constant 0 : index
    %1 = vector.load %arg2[%c0_1, %c0_2] : memref<32x4xf32, #tpu.memory_space<vmem>>, vector<32x4xf32>
    %cst = arith.constant dense<0.000000e+00> : vector<32x8xf32>
    %2 = tpu.matmul %1, %0, %cst {dimension_numbers = #tpu.dot_dimension_numbers<[1], [0], [0], [1], [0, 0, 1, 1], [], []>} : vector<32x4xf32>, vector<4x8xf32>, vector<32x8xf32> -> vector<32x8xf32>
    %c0_3 = arith.constant 0 : index
    %c0_4 = arith.constant 0 : index
    %3 = vector.load %arg3[%c0_3, %c0_4] : memref<32x1xf32, #tpu.memory_space<vmem>>, vector<32x1xf32>
    %4 = vector.broadcast %3 : vector<32x1xf32> to vector<32x8xf32>
    %5 = arith.addf %2, %4 : vector<32x8xf32>
    %cst_5 = arith.constant 0.000000e+00 : f32
    %6 = vector.broadcast %cst_5 : f32 to vector<32x8xf32>
    %7 = arith.maximumf %5, %6 : vector<32x8xf32>
    %c0_6 = arith.constant 0 : index
    %c0_7 = arith.constant 0 : index
    %8 = vector.load %arg4[%c0_6, %c0_7] : memref<2x32xf32, #tpu.memory_space<vmem>>, vector<2x32xf32>
    %cst_8 = arith.constant dense<0.000000e+00> : vector<2x8xf32>
    %9 = tpu.matmul %8, %7, %cst_8 {dimension_numbers = #tpu.dot_dimension_numbers<[1], [0], [0], [1], [0, 0, 1, 1], [], []>} : vector<2x32xf32>, vector<32x8xf32>, vector<2x8xf32> -> vector<2x8xf32>
    %c0_9 = arith.constant 0 : index
    %c0_10 = arith.constant 0 : index
    %10 = vector.load %arg5[%c0_9, %c0_10] : memref<2x1xf32, #tpu.memory_space<vmem>>, vector<2x1xf32>
    %11 = vector.broadcast %10 : vector<2x1xf32> to vector<2x8xf32>
    %12 = arith.addf %9, %11 : vector<2x8xf32>
    %c0_11 = arith.constant 0 : index
    %c0_12 = arith.constant 0 : index
    %13 = vector.load %arg6[%c0_11, %c0_12] : memref<2x8xf32, #tpu.memory_space<vmem>>, vector<2x8xf32>
    tpu.vector_store %arg6[%c0_11, %c0_12], %12 {strides = array<i32>} : memref<2x8xf32, #tpu.memory_space<vmem>>, vector<2x8xf32>,
    return
  }
  func.func @transform_0(%arg0: i32) -> (i32, i32) {
    %c0_i32 = arith.constant 0 : i32
    %c0_i32_0 = arith.constant 0 : i32
    return %c0_i32, %arg0 : i32, i32
  }
  func.func @transform_1(%arg0: i32) -> (i32, i32) {
    %c0_i32 = arith.constant 0 : i32
    %c0_i32_0 = arith.constant 0 : i32
    %c0_i32_1 = arith.constant 0 : i32
    return %c0_i32, %c0_i32_0 : i32, i32
  }
  func.func @transform_2(%arg0: i32) -> (i32, i32) {
    %c0_i32 = arith.constant 0 : i32
    %c0_i32_0 = arith.constant 0 : i32
    %c0_i32_1 = arith.constant 0 : i32
    return %c0_i32, %c0_i32_0 : i32, i32
  }
  func.func @transform_3(%arg0: i32) -> (i32, i32) {
    %c0_i32 = arith.constant 0 : i32
    %c0_i32_0 = arith.constant 0 : i32
    %c0_i32_1 = arith.constant 0 : i32
    return %c0_i32, %c0_i32_0 : i32, i32
  }
  func.func @transform_4(%arg0: i32) -> (i32, i32) {
    %c0_i32 = arith.constant 0 : i32
    %c0_i32_0 = arith.constant 0 : i32
    %c0_i32_1 = arith.constant 0 : i32
    return %c0_i32, %c0_i32_0 : i32, i32
  }
  func.func @transform_5(%arg0: i32) -> (i32, i32) {
    %c0_i32 = arith.constant 0 : i32
    %c0_i32_0 = arith.constant 0 : i32
    return %c0_i32, %arg0 : i32, i32
  }
}

</mosaic_0001>

<llo_original>
// kernel: net_forward_t.1
$region0: #{net_forward_t.1}
  #allocation0 [shape = 'u32[]', space=smem, size = 0x4, offset = 0x4, fixed_abs, tag = 'smem constant byte address 0x4 - core index']
  #allocation1 [shape = 'u32[144,128]{1,0:T(1,128)}', space=vmem, size = 0x12000, scoped, tag = 'internal scratch']
  %s0 = inlined_call_operand.vmem [shape: f32[4,8], index: 0, kind: input, shape index: {}]
  %s1 = inlined_call_operand.vmem [shape: f32[32,4], index: 1, kind: input, shape index: {}]
  %s2 = inlined_call_operand.vmem [shape: f32[32,1], index: 2, kind: input, shape index: {}]
  %s3 = inlined_call_operand.vmem [shape: f32[2,32], index: 3, kind: input, shape index: {}]
  %s4 = inlined_call_operand.vmem [shape: f32[2,1], index: 4, kind: input, shape index: {}]
  %s5 = inlined_call_operand.hbm [shape: f32[2,8], index: 5, kind: output, shape index: {}]
  %s6 = sld [smem:[#allocation0]]
  $region30: #{net_forward_t.1} parent=0
    _
  %s8 = ssub.s32 1, %s6
  %s9 = scalar_select 0, %s8, %s6
  $region1: #{net_forward_t.1} parent=0
    #allocation2 [shape = 'u8[1024]{0}', space=vmem, size = 0x400, scoped, tag = 'output window, operand 0, single buffered']
    #allocation3 [shape = 's32[1]{0}', space=sflag, size = 0x4, scoped, tag = 'scoped memory for net_forward_t.1']
    %10 = vsyncpa [#allocation3], 0
    // Predicated region
    $region2: #{net_forward_t.1} parent=1 // pred_check
      _
    $region3: #{net_forward_t.1} parent=1 // pred_check_branch
      %12 = sbr.rel (0) target = $region5
    $region4: #{net_forward_t.1} parent=1 // pred_region
      _
    $region5: #{net_forward_t.1} parent=1 // pred_fallthru
      _
    // Predicated region
    $region6: #{net_forward_t.1} parent=1 // pred_check
      _
    $region7: #{net_forward_t.1} parent=1 // pred_check_branch
      %14 = sbr.rel (0) target = $region9
    $region8: #{net_forward_t.1} parent=1 // pred_region
      _
    $region9: #{net_forward_t.1} parent=1 // pred_fallthru
      _
    // Predicated region
    $region10: #{net_forward_t.1} parent=1 // pred_check
      _
    $region11: #{net_forward_t.1} parent=1 // pred_check_branch
      %16 = sbr.rel (0) target = $region13
    $region12: #{net_forward_t.1} parent=1 // pred_region
      _
    $region13: #{net_forward_t.1} parent=1 // pred_fallthru
      _
    // Predicated region
    $region14: #{net_forward_t.1} parent=1 // pred_check
      _
    $region15: #{net_forward_t.1} parent=1 // pred_check_branch
      %18 = sbr.rel (0) target = $region17
    $region16: #{net_forward_t.1} parent=1 // pred_region
      _
    $region17: #{net_forward_t.1} parent=1 // pred_fallthru
      _
    // Predicated region
    $region18: #{net_forward_t.1} parent=1 // pred_check
      _
    $region19: #{net_forward_t.1} parent=1 // pred_check_branch
      %20 = sbr.rel (0) target = $region21
    $region20: #{net_forward_t.1} parent=1 // pred_region
      _
    $region21: #{net_forward_t.1} parent=1 // pred_fallthru
      _
    %v21 = vld [vmem:[%s0] sm:$0xf]
    %v22 = vld [vmem:[%s1] sm:$0xff]
    %v23 = vld [vmem:[%s1 + $0x8] sm:$0xff]
    %v24 = vld [vmem:[%s1 + $0x10] sm:$0xff]
    %v25 = vld [vmem:[%s1 + $0x18] sm:$0xff]
    %v26 = vld [vmem:[%s2] sm:$0xff]
    %v27 = vld [vmem:[%s2 + $0x8] sm:$0xff]
    %v28 = vld [vmem:[%s2 + $0x10] sm:$0xff]
    %v29 = vld [vmem:[%s2 + $0x18] sm:$0xff]
    %31 = vset.pattern.permute.xlu0 0
    %32 = vperm.xlu0 %31, %v26
    %v33 = vpop.permute.xlu0 %32
    %36 = vset.pattern.permute.xlu0 0
    %37 = vperm.xlu0 %36, %v27
    %v38 = vpop.permute.xlu0 %37
    %41 = vset.pattern.permute.xlu0 0
    %42 = vperm.xlu0 %41, %v28
    %v43 = vpop.permute.xlu0 %42
    %46 = vset.pattern.permute.xlu0 0
    %47 = vperm.xlu0 %46, %v29
    %v48 = vpop.permute.xlu0 %47
    %vm50 = vcmask 31744
    %v52 = vsel %vm50, %v22, 0
    %v55 = vsel %vm50, %v23, 0
    %v58 = vsel %vm50, %v24, 0
    %v61 = vsel %vm50, %v25, 0
    %vm63 = vcmask 1043456
    %v65 = vsel %vm63, %v21, 0
    %67 = vmatprep.subr.mxu0 0.0
    %68 = vmatpush1.msra.mxu0 %v65
    %69 = vmatprep.subr.mxu0 0.0
    %70 = vmatpush1.msra.mxu0 0.0
    %71 = vmatprep.subr.mxu0 0.0
    %72 = vmatpush1.msra.mxu0 0.0
    %73 = vmatprep.subr.mxu0 0.0
    %74 = vmatpush1.msra.mxu0 0.0
    %75 = vmatprep.subr.mxu0 0.0
    %76 = vmatpush1.msra.mxu0 0.0
    %77 = vmatprep.subr.mxu0 0.0
    %78 = vmatpush1.msra.mxu0 0.0
    %79 = vmatprep.subr.mxu0 0.0
    %80 = vmatpush1.msra.mxu0 0.0
    %81 = vmatprep.subr.mxu0 0.0
    %82 = vmatpush1.msra.mxu0 0.0
    %83 = vmatprep.subr.mxu0 0.0
    %84 = vmatpush1.msra.mxu0 0.0
    %85 = vmatprep.subr.mxu0 0.0
    %86 = vmatpush1.msra.mxu0 0.0
    %87 = vmatprep.subr.mxu0 0.0
    %88 = vmatpush1.msra.mxu0 0.0
    %89 = vmatprep.subr.mxu0 0.0
    %90 = vmatpush1.msra.mxu0 0.0
    %91 = vmatprep.subr.mxu0 0.0
    %92 = vmatpush1.msra.mxu0 0.0
    %93 = vmatprep.subr.mxu0 0.0
    %94 = vmatpush1.msra.mxu0 0.0
    %95 = vmatprep.subr.mxu0 0.0
    %96 = vmatpush1.msra.mxu0 0.0
    %97 = vmatprep.subr.mxu0 0.0
    %98 = vmatpush1.msra.mxu0 0.0
    %99 = vmatprep.subr.mxu0 0.0
    %100 = vmatpush1.msra.mxu0 0.0
    %101 = vmatprep.subr.mxu0 0.0
    %102 = vmatpush1.msra.mxu0 0.0
    %103 = vmatprep.subr.mxu0 0.0
    %104 = vmatpush1.msra.mxu0 0.0
    %105 = vmatprep.subr.mxu0 0.0
    %106 = vmatpush1.msra.mxu0 0.0
    %107 = vmatprep.subr.mxu0 0.0
    %108 = vmatpush1.msra.mxu0 0.0
    %109 = vmatprep.subr.mxu0 0.0
    %110 = vmatpush1.msra.mxu0 0.0
    %111 = vmatprep.subr.mxu0 0.0
    %112 = vmatpush1.msra.mxu0 0.0
    %113 = vmatprep.subr.mxu0 0.0
    %114 = vmatpush1.msra.mxu0 0.0
    %115 = vmatprep.subr.mxu0 0.0
    %116 = vmatpush1.msra.mxu0 0.0
    %117 = vmatprep.subr.mxu0 0.0
    %118 = vmatpush1.msra.mxu0 0.0
    %119 = vmatprep.subr.mxu0 0.0
    %120 = vmatpush1.msra.mxu0 0.0
    %121 = vmatprep.subr.mxu0 0.0
    %122 = vmatpush1.msra.mxu0 0.0
    %123 = vmatprep.subr.mxu0 0.0
    %124 = vmatpush1.msra.mxu0 0.0
    %125 = vmatprep.subr.mxu0 0.0
    %126 = vmatpush1.msra.mxu0 0.0
    %127 = vmatprep.subr.mxu0 0.0
    %128 = vmatpush1.msra.mxu0 0.0
    %129 = vmatprep.subr.mxu0 0.0
    %130 = vmatpush1.msra.mxu0 0.0
    %131 = vmatprep.mubr.f32.mxu0 0.0
    %132 = vmatmul.mubr.f32.gmra.mrb[0].mxu0 %v52
    %v133 = vpop.f32.mrb[0].mxu0
    %v134 = vadd.f32 %v33, %v133
    %v135 = vpop.f32.mrb[0].mxu0
    %136 = vmatprep.mubr.f32.mxu0 0.0
    %137 = vmatmul.mubr.f32.gmra.mrb[0].mxu0 %v55
    %v138 = vpop.f32.mrb[0].mxu0
    %v139 = vadd.f32 %v38, %v138
    %v140 = vpop.f32.mrb[0].mxu0
    %141 = vmatprep.mubr.f32.mxu0 0.0
    %142 = vmatmul.mubr.f32.gmra.mrb[0].mxu0 %v58
    %v143 = vpop.f32.mrb[0].mxu0
    %v144 = vadd.f32 %v43, %v143
    %v145 = vpop.f32.mrb[0].mxu0
    %146 = vmatprep.mubr.f32.mxu0 0.0
    %147 = vmatmul.mubr.f32.gmra.mrb[0].mxu0 %v61
    %v148 = vpop.f32.mrb[0].mxu0
    %v149 = vadd.f32 %v48, %v148
    %v150 = vpop.f32.mrb[0].mxu0
    %151 = vdwg.mxu0
    %v152 = vmax.f32 %v134, 0.0
    %v153 = vmax.f32 %v139, 0.0
    %v154 = vmax.f32 %v144, 0.0
    %v155 = vmax.f32 %v149, 0.0
    %v156 = vld [vmem:[%s3] sm:$0x3]
    %v157 = vld [vmem:[%s4] sm:$0x3]
    %159 = vset.pattern.permute.xlu0 0
    %160 = vperm.xlu0 %159, %v157
    %v161 = vpop.permute.xlu0 %160
    %vm163 = vcmask 261120
    %v165 = vsel %vm163, %v156, 0
    %167 = vmatprep.subr.mxu0 0.0
    %168 = vmatpush1.msra.mxu0 %v152
    %169 = vmatprep.subr.mxu0 0.0
    %170 = vmatpush1.msra.mxu0 %v153
    %171 = vmatprep.subr.mxu0 0.0
    %172 = vmatpush1.msra.mxu0 %v154
    %173 = vmatprep.subr.mxu0 0.0
    %174 = vmatpush1.msra.mxu0 %v155
    %175 = vmatprep.subr.mxu0 0.0
    %176 = vmatpush1.msra.mxu0 0.0
    %177 = vmatprep.subr.mxu0 0.0
    %178 = vmatpush1.msra.mxu0 0.0
    %179 = vmatprep.subr.mxu0 0.0
    %180 = vmatpush1.msra.mxu0 0.0
    %181 = vmatprep.subr.mxu0 0.0
    %182 = vmatpush1.msra.mxu0 0.0
    %183 = vmatprep.subr.mxu0 0.0
    %184 = vmatpush1.msra.mxu0 0.0
    %185 = vmatprep.subr.mxu0 0.0
    %186 = vmatpush1.msra.mxu0 0.0
    %187 = vmatprep.subr.mxu0 0.0
    %188 = vmatpush1.msra.mxu0 0.0
    %189 = vmatprep.subr.mxu0 0.0
    %190 = vmatpush1.msra.mxu0 0.0
    %191 = vmatprep.subr.mxu0 0.0
    %192 = vmatpush1.msra.mxu0 0.0
    %193 = vmatprep.subr.mxu0 0.0
    %194 = vmatpush1.msra.mxu0 0.0
    %195 = vmatprep.subr.mxu0 0.0
    %196 = vmatpush1.msra.mxu0 0.0
    %197 = vmatprep.subr.mxu0 0.0
    %198 = vmatpush1.msra.mxu0 0.0
    %199 = vmatprep.subr.mxu0 0.0
    %200 = vmatpush1.msra.mxu0 0.0
    %201 = vmatprep.subr.mxu0 0.0
    %202 = vmatpush1.msra.mxu0 0.0
    %203 = vmatprep.subr.mxu0 0.0
    %204 = vmatpush1.msra.mxu0 0.0
    %205 = vmatprep.subr.mxu0 0.0
    %206 = vmatpush1.msra.mxu0 0.0
    %207 = vmatprep.subr.mxu0 0.0
    %208 = vmatpush1.msra.mxu0 0.0
    %209 = vmatprep.subr.mxu0 0.0
    %210 = vmatpush1.msra.mxu0 0.0
    %211 = vmatprep.subr.mxu0 0.0
    %212 = vmatpush1.msra.mxu0 0.0
    %213 = vmatprep.subr.mxu0 0.0
    %214 = vmatpush1.msra.mxu0 0.0
    %215 = vmatprep.subr.mxu0 0.0
    %216 = vmatpush1.msra.mxu0 0.0
    %217 = vmatprep.subr.mxu0 0.0
    %218 = vmatpush1.msra.mxu0 0.0
    %219 = vmatprep.subr.mxu0 0.0
    %220 = vmatpush1.msra.mxu0 0.0
    %221 = vmatprep.subr.mxu0 0.0
    %222 = vmatpush1.msra.mxu0 0.0
    %223 = vmatprep.subr.mxu0 0.0
    %224 = vmatpush1.msra.mxu0 0.0
    %225 = vmatprep.subr.mxu0 0.0
    %226 = vmatpush1.msra.mxu0 0.0
    %227 = vmatprep.subr.mxu0 0.0
    %228 = vmatpush1.msra.mxu0 0.0
    %229 = vmatprep.subr.mxu0 0.0
    %230 = vmatpush1.msra.mxu0 0.0
    %231 = vmatprep.mubr.f32.mxu0 0.0
    %232 = vmatmul.mubr.f32.gmra.mrb[0].mxu0 %v165
    %v233 = vpop.f32.mrb[0].mxu0
    %v234 = vadd.f32 %v161, %v233
    %v235 = vpop.f32.mrb[0].mxu0
    %236 = vdwg.mxu0
    %vm237 = vcmask 58368
    %238 = vst.msk [vmem:[#allocation2] sm:$0x3] %vm237, %v234
    // Predicated region
    $region22: #{net_forward_t.1} parent=1 // pred_check
      _
    $region23: #{net_forward_t.1} parent=1 // pred_check_branch
      %240 = sbr.rel (0) target = $region25
    $region24: #{net_forward_t.1} parent=1 // pred_region
      %s242 = ssub.s32 32, 32
      %243 = vsyncadd [#allocation3], %s242
      %s245 = sshll.u32 [#allocation2], 4
      %s246 = int_to_ptr.vmem [resolvable:$true] %s245
      %248 = dma.vmem_to_hbm [thread:$0]  %s246, 32, %s5, [#allocation3]
    $region25: #{net_forward_t.1} parent=1 // pred_fallthru
      _
    // Predicated region
    $region26: #{net_forward_t.1} parent=1 // pred_check
      _
    $region27: #{net_forward_t.1} parent=1 // pred_check_branch
      %250 = sbr.rel (0) target = $region29
    $region28: #{net_forward_t.1} parent=1 // pred_region
      %251 = dma.done [#allocation3], 32
    $region29: #{net_forward_t.1} parent=1 // pred_fallthru
      _
    %252 = vsyncpa [#allocation3], 1

</llo_original>
